<compile_context>
chip_gen: v5e
topology: v5e:2x2
jax: 0.10.0
libtpu: 0.0.40
codegen_flags: <defaults>
</compile_context>

<pallas_src>
import jax
import jax.numpy as jnp
from jax.experimental import pallas as pl
from jax.experimental.pallas import tpu as pltpu

_HIDDEN_PAD = 128  # hidden dim 100 zero-padded to a full lane tile


def _classifier_kernel(xT_ref, w1_ref, b1_ref, w2_ref, b2_ref, out_ref):
    """Fused feature-major MLP forward for one batch tile.

    xT_ref : (D_IN, TB)     input tile: features on sublanes, batch on lanes
    w1_ref : (H_PAD, D_IN)  Linear(16,100) weight, PyTorch (out,in) layout, zero-padded
    b1_ref : (H_PAD, 1)
    w2_ref : (1, H_PAD)     Linear(100,1) weight, zero-padded
    b2_ref : (1, 1)         scalar bias in SMEM
    out_ref: (1, TB)        lane-dense sigmoid output row
    """
    xT = xT_ref[...]
    # Linear(16, 100) + Tanh  (MXU matmul, EUP tanh), feature-major -> (H_PAD, TB)
    h = jnp.dot(w1_ref[...], xT, preferred_element_type=jnp.float32) + b1_ref[...]
    h = jnp.tanh(h)
    # Linear(100, 1) + Sigmoid -> (1, TB) lane-dense row (cheap epilogue)
    y = jnp.dot(w2_ref[...], h, preferred_element_type=jnp.float32) + b2_ref[0, 0]
    out_ref[...] = (1.0 / (1.0 + jnp.exp(-y))).astype(out_ref.dtype)


def prepare_classifier_params(w1, b1, w2, b2):
    """One-time parameter prep (hoisted out of the per-call hot path).

    Accepts PyTorch nn.Linear layouts: w1 (100, 16), b1 (100,), w2 (1, 100), b2 (1,).
    Zero-pads the hidden dim 100 -> 128; padded units are mathematically inert.
    """
    hidden, d_in = w1.shape
    assert w2.shape == (1, hidden), w2.shape
    pad = _HIDDEN_PAD - hidden
    assert pad >= 0, "hidden dim larger than padded tile"
    w1p = jnp.pad(w1.astype(jnp.float32), ((0, pad), (0, 0)))              # (128, 16)
    b1p = jnp.pad(b1.astype(jnp.float32), ((0, pad),)).reshape(_HIDDEN_PAD, 1)
    w2p = jnp.pad(w2.astype(jnp.float32), ((0, 0), (0, pad)))              # (1, 128)
    b2p = b2.astype(jnp.float32).reshape(1, 1)
    return w1p, b1p, w2p, b2p


def classifier_forward(x, params, *, batch_tile=1024):
    """x: (B, ...) with prod(trailing dims) == 16.  Returns (B, 1) float32."""
    w1p, b1p, w2p, b2p = params
    B = x.shape[0]
    d_in = w1p.shape[1]
    x2 = x.reshape(B, -1).astype(jnp.float32)   # torch.flatten(x, start_dim=1)
    assert x2.shape[1] == d_in, (x2.shape, d_in)

    assert batch_tile % 128 == 0, "batch_tile must be a multiple of 128 (lane width)"
    # Don't tile wider than the (lane-rounded) batch; keeps padding waste small.
    tile = max(128, min(batch_tile, pl.cdiv(B, 128) * 128))
    b_pad = pl.cdiv(B, tile) * tile
    n_tiles = b_pad // tile

    # Feature-major layout: batch on the lane axis -> lane-dense matmuls,
    # activations and output stores.  Single wrapper pad+transpose pass.
    xT = jnp.pad(x2, ((0, b_pad - B), (0, 0))).T          # (16, b_pad)

    out = pl.pallas_call(
        _classifier_kernel,
        out_shape=jax.ShapeDtypeStruct((n_tiles, 1, tile), jnp.float32),
        grid_spec=pltpu.PrefetchScalarGridSpec(
            num_scalar_prefetch=0,
            grid=(n_tiles,),
            in_specs=[
                pl.BlockSpec((d_in, tile), lambda i: (0, i)),            # x^T tile
                pl.BlockSpec((_HIDDEN_PAD, d_in), lambda i: (0, 0)),     # W1 (VMEM-resident)
                pl.BlockSpec((_HIDDEN_PAD, 1), lambda i: (0, 0)),        # b1 (VMEM-resident)
                pl.BlockSpec((1, _HIDDEN_PAD), lambda i: (0, 0)),        # W2 (VMEM-resident)
                pl.BlockSpec(memory_space=pltpu.MemorySpace.SMEM),       # b2 scalar
            ],
            out_specs=pl.BlockSpec((None, 1, tile), lambda i: (i, 0, 0)),
        ),
        compiler_params=pltpu.CompilerParams(
            dimension_semantics=("parallel",),   # megacore-shardable batch axis (v7x)
        ),
    )(xT, w1p, b1p, w2p, b2p)

    # (n_tiles, 1, tile) -> (b_pad,) -> drop pad rows -> (B, 1)
    return out.reshape(b_pad)[:B].reshape(B, 1)


def classifier_reference(x, w1, b1, w2, b2):
    """Pure-JAX transcription of the PyTorch forward (PyTorch weight layouts)."""
    x2 = x.reshape(x.shape[0], -1)
    h = jnp.tanh(x2 @ w1.T + b1)
    return jax.nn.sigmoid(h @ w2.T + b2)


if __name__ == "__main__":
    # Small shapes consistent with the module: flattened feature dim must be 16.
    # B is deliberately NOT a multiple of the batch tile and spans several tiles,
    # exercising the multi-tile grid and the padded tail.
    B, D_IN, HIDDEN = 300, 16, 100

    key = jax.random.PRNGKey(0)
    kx, kw1, kb1, kw2, kb2 = jax.random.split(key, 5)
    x = jax.random.normal(kx, (B, 4, 4), dtype=jnp.float32)   # flatten -> (B, 16)
    # PyTorch nn.Linear layouts: weight is (out_features, in_features).
    w1 = jax.random.normal(kw1, (HIDDEN, D_IN), dtype=jnp.float32) * 0.1
    b1 = jax.random.normal(kb1, (HIDDEN,), dtype=jnp.float32) * 0.1
    w2 = jax.random.normal(kw2, (1, HIDDEN), dtype=jnp.float32) * 0.1
    b2 = jax.random.normal(kb2, (1,), dtype=jnp.float32) * 0.1

    params = prepare_classifier_params(w1, b1, w2, b2)
    out = classifier_forward(x, params, batch_tile=128)   # 3 grid steps + pad tail
    out = jax.block_until_ready(out)

    ref = classifier_reference(x, w1, b1, w2, b2)
    assert out.shape == (B, 1), out.shape
    if not jnp.allclose(out, ref, rtol=1e-5, atol=1e-5):
        raise SystemExit(
            f"mismatch: max abs err {float(jnp.max(jnp.abs(out - ref)))}")
    print("KERNEL_OK")
</pallas_src>

<mosaic_0001>
module attributes {stable_mosaic.version = 11 : i64} {
  func.func @_classifier_kernel(%arg0: i32, %arg1: memref<16x128xf32, #tpu.memory_space<vmem>>, %arg2: memref<128x16xf32, #tpu.memory_space<vmem>>, %arg3: memref<128x1xf32, #tpu.memory_space<vmem>>, %arg4: memref<1x128xf32, #tpu.memory_space<vmem>>, %arg5: memref<1x1xf32, #tpu.memory_space<smem>>, %arg6: memref<1x1x128xf32, #tpu.memory_space<vmem>>) attributes {dimension_semantics = [#tpu.dimension_semantics<parallel>], iteration_bounds = array<i64: 3>, scalar_prefetch = 0 : i64, scratch_operands = 0 : i64, tpu.core_type = #tpu.core_type<tc>, window_params = [{transform_indices = @transform_0, window_bounds = array<i64: 16, 128>}, {pipeline_mode = #tpu.pipeline_mode<synchronous>, transform_indices = @transform_1, window_bounds = array<i64: 128, 16>}, {pipeline_mode = #tpu.pipeline_mode<synchronous>, transform_indices = @transform_2, window_bounds = array<i64: 128, 1>}, {pipeline_mode = #tpu.pipeline_mode<synchronous>, transform_indices = @transform_3, window_bounds = array<i64: 1, 128>}, {transform_indices = @transform_4, window_bounds = array<i64: 1, 1>}, {transform_indices = @transform_5, window_bounds = array<i64: 1, 1, 128>}]} {
    %c0 = arith.constant 0 : index
    %c0_0 = arith.constant 0 : index
    %0 = vector.load %arg1[%c0, %c0_0] : memref<16x128xf32, #tpu.memory_space<vmem>>, vector<16x128xf32>
    %c0_1 = arith.constant 0 : index
    %c0_2 = arith.constant 0 : index
    %1 = vector.load %arg2[%c0_1, %c0_2] : memref<128x16xf32, #tpu.memory_space<vmem>>, vector<128x16xf32>
    %cst = arith.constant dense<0.000000e+00> : vector<128x128xf32>
    %2 = tpu.matmul %1, %0, %cst {dimension_numbers = #tpu.dot_dimension_numbers<[1], [0], [0], [1], [0, 0, 1, 1], [], []>} : vector<128x16xf32>, vector<16x128xf32>, vector<128x128xf32> -> vector<128x128xf32>
    %c0_3 = arith.constant 0 : index
    %c0_4 = arith.constant 0 : index
    %3 = vector.load %arg3[%c0_3, %c0_4] : memref<128x1xf32, #tpu.memory_space<vmem>>, vector<128x1xf32>
    %4 = vector.broadcast %3 : vector<128x1xf32> to vector<128x128xf32>
    %5 = arith.addf %2, %4 : vector<128x128xf32>
    %6 = math.tanh %5 : vector<128x128xf32>
    %c0_5 = arith.constant 0 : index
    %c0_6 = arith.constant 0 : index
    %7 = vector.load %arg4[%c0_5, %c0_6] : memref<1x128xf32, #tpu.memory_space<vmem>>, vector<1x128xf32>
    %cst_7 = arith.constant dense<0.000000e+00> : vector<1x128xf32>
    %8 = tpu.matmul %7, %6, %cst_7 {dimension_numbers = #tpu.dot_dimension_numbers<[1], [0], [0], [1], [0, 0, 1, 1], [], []>} : vector<1x128xf32>, vector<128x128xf32>, vector<1x128xf32> -> vector<1x128xf32>
    %c0_8 = arith.constant 0 : index
    %c0_9 = arith.constant 0 : index
    %9 = memref.load %arg5[%c0_8, %c0_9] : memref<1x1xf32, #tpu.memory_space<smem>>
    %10 = vector.broadcast %9 : f32 to vector<1x128xf32>
    %11 = arith.addf %8, %10 : vector<1x128xf32>
    %cst_10 = arith.constant 0.000000e+00 : f32
    %12 = vector.broadcast %cst_10 : f32 to vector<1x128xf32>
    %13 = arith.subf %12, %11 : vector<1x128xf32>
    %14 = math.exp %13 : vector<1x128xf32>
    %cst_11 = arith.constant 1.000000e+00 : f32
    %15 = vector.broadcast %cst_11 : f32 to vector<1x128xf32>
    %16 = arith.addf %15, %14 : vector<1x128xf32>
    %cst_12 = arith.constant 1.000000e+00 : f32
    %17 = vector.broadcast %cst_12 : f32 to vector<1x128xf32>
    %18 = arith.divf %17, %16 : vector<1x128xf32>
    %c0_13 = arith.constant 0 : index
    %c0_14 = arith.constant 0 : index
    %c0_15 = arith.constant 0 : index
    %19 = vector.load %arg6[%c0_13, %c0_14, %c0_15] : memref<1x1x128xf32, #tpu.memory_space<vmem>>, vector<1x1x128xf32>
    %20 = vector.shape_cast %19 : vector<1x1x128xf32> to vector<1x128xf32>
    %21 = vector.shape_cast %18 : vector<1x128xf32> to vector<1x1x128xf32>
    tpu.vector_store %arg6[%c0_13, %c0_14, %c0_15], %21 {strides = array<i32>} : memref<1x1x128xf32, #tpu.memory_space<vmem>>, vector<1x1x128xf32>,
    return
  }
  func.func @transform_0(%arg0: i32) -> (i32, i32) {
    %c0_i32 = arith.constant 0 : i32
    %c0_i32_0 = arith.constant 0 : i32
    return %c0_i32, %arg0 : i32, i32
  }
  func.func @transform_1(%arg0: i32) -> (i32, i32) {
    %c0_i32 = arith.constant 0 : i32
    %c0_i32_0 = arith.constant 0 : i32
    %c0_i32_1 = arith.constant 0 : i32
    return %c0_i32, %c0_i32_0 : i32, i32
  }
  func.func @transform_2(%arg0: i32) -> (i32, i32) {
    %c0_i32 = arith.constant 0 : i32
    %c0_i32_0 = arith.constant 0 : i32
    %c0_i32_1 = arith.constant 0 : i32
    return %c0_i32, %c0_i32_0 : i32, i32
  }
  func.func @transform_3(%arg0: i32) -> (i32, i32) {
    %c0_i32 = arith.constant 0 : i32
    %c0_i32_0 = arith.constant 0 : i32
    %c0_i32_1 = arith.constant 0 : i32
    return %c0_i32, %c0_i32_0 : i32, i32
  }
  func.func @transform_4(%arg0: i32) -> (i32, i32) {
    %c0_i32 = arith.constant 0 : i32
    %c0_i32_0 = arith.constant 0 : i32
    %c0_i32_1 = arith.constant 0 : i32
    return %c0_i32, %c0_i32_0 : i32, i32
  }
  func.func @transform_5(%arg0: i32) -> (i32, i32, i32) {
    %c0_i32 = arith.constant 0 : i32
    %c0_i32_0 = arith.constant 0 : i32
    %c0_i32_1 = arith.constant 0 : i32
    return %arg0, %c0_i32, %c0_i32_0 : i32, i32, i32
  }
}

</mosaic_0001>

<llo_original>
// kernel: tpu_custom_call.1
$region0: #{tpu_custom_call.1}
  #allocation0 [shape = 'u32[]', space=smem, size = 0x4, offset = 0x4, fixed_abs, tag = 'smem constant byte address 0x4 - core index']
  #allocation1 [shape = 'u32[72,128]{1,0:T(1,128)}', space=vmem, size = 0x9000, scoped, tag = 'internal scratch']
  #allocation2 [shape = 'f32[1,1]{1,0:T(1,128)S(6)}', space=smem, size = 0x200, scoped, tag = 'scoped memory for tpu_custom_call.1']
  %s0 = inlined_call_operand.vmem [shape: f32[16,384], index: 0, kind: input, shape index: {}]
  %s1 = inlined_call_operand.vmem [shape: f32[128,16], index: 1, kind: input, shape index: {}]
  %s2 = inlined_call_operand.vmem [shape: f32[128,1], index: 2, kind: input, shape index: {}]
  %s3 = inlined_call_operand.vmem [shape: f32[1,128], index: 3, kind: input, shape index: {}]
  %s4 = inlined_call_operand.<no memory space> [shape: f32[1,1], index: 4, kind: input, shape index: {}]
  %s5 = inlined_call_operand.hbm [shape: f32[3,1,128], index: 5, kind: output, shape index: {}]
  %s6 = sld [smem:[#allocation0]]
  $region91: #{tpu_custom_call.1} parent=0
    _
  %s8 = ssub.s32 1, %s6
  %s9 = scalar_select 0, %s8, %s6
  %10 = sst [smem:[#allocation2]] %s4
  $region1: #{tpu_custom_call.1} parent=0
    #allocation3 [shape = 'u8[16384]{0}', space=vmem, size = 0x4000, scoped, tag = 'input window, operand 0']
    #allocation4 [shape = 'u8[1024]{0}', space=vmem, size = 0x400, scoped, tag = 'output window, operand 0']
    #allocation5 [shape = 's32[2]{0}', space=sflag, size = 0x8, scoped, tag = 'scoped memory for tpu_custom_call.1']
    %11 = vsyncpa [#allocation5], 0
    %s12 = scalar_lea.sflag [#allocation5], 1
    %13 = vsyncpa %s12, 0
    loop: start=0, step=1, limit=5
    $region2: #{tpu_custom_call.1} parent=1 // loop_pre_header
      _
    $region3: #{tpu_custom_call.1} parent=1 // loop_header
      %s15 = sphi 0, %s19
      %p16 = scmp.ge.s32.totalorder %s15, 5
      %s25 = sphi 0, %s27
      %s28 = sphi 0, %s25
      %s29 = sphi 0, %s28
      %s45 = sphi 0, %s29
      %s49 = sphi 0, %s49
      %s51 = sphi 0, %s49
      %s52 = sphi 0, %s51
      %s66 = sphi 0, %s52
      %s70 = sphi 0, %s70
      %s72 = sphi 0, %s70
      %s73 = sphi 0, %s72
      %s87 = sphi 0, %s73
      %s91 = sphi 0, %s91
      %s93 = sphi 0, %s91
      %s94 = sphi 0, %s93
      %s108 = sphi 0, %s94
      %s112 = sphi 0, %s112
      %s114 = sphi 0, %s112
      %s115 = sphi 0, %s114
      %s129 = sphi 0, %s115
      %s135 = sphi 0, %s137
      %s138 = sphi 0, %s135
      %s139 = sphi 0, %s138
      %s155 = sphi 0, %s139
    $region4: #{tpu_custom_call.1} parent=1 // loop_header_branch
      %18 = sbr.rel (%p16) target = $region8
    $region5: #{tpu_custom_call.1} parent=1 // loop_body
      %s20 = ssub.s32 %s15, 1
      %s21 = ssub.s32 %s15, 2
      %s22 = sadd.s32 %s15, 1
      %s23 = ssub.s32 %s15, %s22
      %p24 = scmp.eq.s32.totalorder %s23, 0
      %s26 = sadd.s32 %s25, 1
      %s27 = scalar_select %p24, %s25, %s26
      %p30 = pneg %p24
      %p31 = scmp.eq.s32.totalorder %s15, 2
      %p32 = por %p30, %p31
      %p33 = scmp.ne.s32.totalorder %s25, %s28
      %p34 = scmp.eq.s32.totalorder %s15, 0
      %p35 = por %p33, %p34
      %p36 = scmp.ne.s32.totalorder %s25, %s28
      %p37 = scmp.eq.s32.totalorder %s20, 2
      %p38 = por %p36, %p37
      %p39 = scmp.ne.s32.totalorder %s28, %s29
      %p40 = scmp.eq.s32.totalorder %s20, 0
      %p41 = por %p39, %p40
      %p42 = scmp.ne.s32.totalorder %s28, %s29
      %p43 = scmp.eq.s32.totalorder %s21, 2
      %p44 = por %p42, %p43
      %p46 = scmp.ne.s32.totalorder %s29, %s45
      %p47 = scmp.eq.s32.totalorder %s21, 0
      %p48 = por %p46, %p47
      %s50 = sadd.s32 %s49, 1
      %p53 = scmp.eq.s32.totalorder %s15, 2
      %p54 = scmp.ne.s32.totalorder %s49, %s51
      %p55 = scmp.eq.s32.totalorder %s15, 0
      %p56 = por %p54, %p55
      %p57 = scmp.ne.s32.totalorder %s49, %s51
      %p58 = scmp.eq.s32.totalorder %s20, 2
      %p59 = por %p57, %p58
      %p60 = scmp.ne.s32.totalorder %s51, %s52
      %p61 = scmp.eq.s32.totalorder %s20, 0
      %p62 = por %p60, %p61
      %p63 = scmp.ne.s32.totalorder %s51, %s52
      %p64 = scmp.eq.s32.totalorder %s21, 2
      %p65 = por %p63, %p64
      %p67 = scmp.ne.s32.totalorder %s52, %s66
      %p68 = scmp.eq.s32.totalorder %s21, 0
      %p69 = por %p67, %p68
      %s71 = sadd.s32 %s70, 1
      %p74 = scmp.eq.s32.totalorder %s15, 2
      %p75 = scmp.ne.s32.totalorder %s70, %s72
      %p76 = scmp.eq.s32.totalorder %s15, 0
      %p77 = por %p75, %p76
      %p78 = scmp.ne.s32.totalorder %s70, %s72
      %p79 = scmp.eq.s32.totalorder %s20, 2
      %p80 = por %p78, %p79
      %p81 = scmp.ne.s32.totalorder %s72, %s73
      %p82 = scmp.eq.s32.totalorder %s20, 0
      %p83 = por %p81, %p82
      %p84 = scmp.ne.s32.totalorder %s72, %s73
      %p85 = scmp.eq.s32.totalorder %s21, 2
      %p86 = por %p84, %p85
      %p88 = scmp.ne.s32.totalorder %s73, %s87
      %p89 = scmp.eq.s32.totalorder %s21, 0
      %p90 = por %p88, %p89
      %s92 = sadd.s32 %s91, 1
      %p95 = scmp.eq.s32.totalorder %s15, 2
      %p96 = scmp.ne.s32.totalorder %s91, %s93
      %p97 = scmp.eq.s32.totalorder %s15, 0
      %p98 = por %p96, %p97
      %p99 = scmp.ne.s32.totalorder %s91, %s93
      %p100 = scmp.eq.s32.totalorder %s20, 2
      %p101 = por %p99, %p100
      %p102 = scmp.ne.s32.totalorder %s93, %s94
      %p103 = scmp.eq.s32.totalorder %s20, 0
      %p104 = por %p102, %p103
      %p105 = scmp.ne.s32.totalorder %s93, %s94
      %p106 = scmp.eq.s32.totalorder %s21, 2
      %p107 = por %p105, %p106
      %p109 = scmp.ne.s32.totalorder %s94, %s108
      %p110 = scmp.eq.s32.totalorder %s21, 0
      %p111 = por %p109, %p110
      %s113 = sadd.s32 %s112, 1
      %p116 = scmp.eq.s32.totalorder %s15, 2
      %p117 = scmp.ne.s32.totalorder %s112, %s114
      %p118 = scmp.eq.s32.totalorder %s15, 0
      %p119 = por %p117, %p118
      %p120 = scmp.ne.s32.totalorder %s112, %s114
      %p121 = scmp.eq.s32.totalorder %s20, 2
      %p122 = por %p120, %p121
      %p123 = scmp.ne.s32.totalorder %s114, %s115
      %p124 = scmp.eq.s32.totalorder %s20, 0
      %p125 = por %p123, %p124
      %p126 = scmp.ne.s32.totalorder %s114, %s115
      %p127 = scmp.eq.s32.totalorder %s21, 2
      %p128 = por %p126, %p127
      %p130 = scmp.ne.s32.totalorder %s115, %s129
      %p131 = scmp.eq.s32.totalorder %s21, 0
      %p132 = por %p130, %p131
      %s133 = ssub.s32 %s15, %s22
      %p134 = scmp.eq.s32.totalorder %s133, 0
      %s136 = sadd.s32 %s135, 1
      %s137 = scalar_select %p134, %s135, %s136
      %p140 = pneg %p134
      %p141 = scmp.eq.s32.totalorder %s15, 2
      %p142 = por %p140, %p141
      %p143 = scmp.ne.s32.totalorder %s135, %s138
      %p144 = scmp.eq.s32.totalorder %s15, 0
      %p145 = por %p143, %p144
      %p146 = scmp.ne.s32.totalorder %s135, %s138
      %p147 = scmp.eq.s32.totalorder %s20, 2
      %p148 = por %p146, %p147
      %p149 = scmp.ne.s32.totalorder %s138, %s139
      %p150 = scmp.eq.s32.totalorder %s20, 0
      %p151 = por %p149, %p150
      %p152 = scmp.ne.s32.totalorder %s138, %s139
      %p153 = scmp.eq.s32.totalorder %s21, 2
      %p154 = por %p152, %p153
      %p156 = scmp.ne.s32.totalorder %s139, %s155
      %p157 = scmp.eq.s32.totalorder %s21, 0
      %p158 = por %p156, %p157
      %p159 = scmp.le.s32.totalorder 1, %s15
      %p160 = scmp.lt.s32.totalorder %s15, 4
      %p161 = pnand %p159, %p160
      %p162 = pneg %p161
      // Predicated region
      $region9: #{tpu_custom_call.1} parent=5 // pred_check
        _
      $region10: #{tpu_custom_call.1} parent=5 // pred_check_branch
        %164 = sbr.rel (%p161) target = $region12
      $region11: #{tpu_custom_call.1} parent=5 // pred_region
        %s165 = ssub.s32 %s15, 1
        // Predicated region
        $region13: #{tpu_custom_call.1} parent=11 // pred_check
          %p166 = pneg %p62
        $region14: #{tpu_custom_call.1} parent=11 // pred_check_branch
          %168 = sbr.rel (%p166) target = $region16
        $region15: #{tpu_custom_call.1} parent=11 // pred_region
          _
        $region16: #{tpu_custom_call.1} parent=11 // pred_fallthru
          _
        // Predicated region
        $region17: #{tpu_custom_call.1} parent=11 // pred_check
          %p169 = pneg %p83
        $region18: #{tpu_custom_call.1} parent=11 // pred_check_branch
          %171 = sbr.rel (%p169) target = $region20
        $region19: #{tpu_custom_call.1} parent=11 // pred_region
          _
        $region20: #{tpu_custom_call.1} parent=11 // pred_fallthru
          _
        // Predicated region
        $region21: #{tpu_custom_call.1} parent=11 // pred_check
          %p172 = pneg %p104
        $region22: #{tpu_custom_call.1} parent=11 // pred_check_branch
          %174 = sbr.rel (%p172) target = $region24
        $region23: #{tpu_custom_call.1} parent=11 // pred_region
          _
        $region24: #{tpu_custom_call.1} parent=11 // pred_fallthru
          _
        // Predicated region
        $region25: #{tpu_custom_call.1} parent=11 // pred_check
          %p175 = pneg %p125
        $region26: #{tpu_custom_call.1} parent=11 // pred_check_branch
          %177 = sbr.rel (%p175) target = $region28
        $region27: #{tpu_custom_call.1} parent=11 // pred_region
          _
        $region28: #{tpu_custom_call.1} parent=11 // pred_fallthru
          _
      $region12: #{tpu_custom_call.1} parent=5 // pred_fallthru
        _
      %p178 = scmp.lt.s32.totalorder %s15, 3
      // Predicated region
      $region29: #{tpu_custom_call.1} parent=5 // pred_check
        %p179 = pneg %p178
      $region30: #{tpu_custom_call.1} parent=5 // pred_check_branch
        %181 = sbr.rel (%p179) target = $region32
      $region31: #{tpu_custom_call.1} parent=5 // pred_region
        // Predicated region
        $region33: #{tpu_custom_call.1} parent=31 // pred_check
          %p182 = pneg %p35
        $region34: #{tpu_custom_call.1} parent=31 // pred_check_branch
          %184 = sbr.rel (%p182) target = $region36
        $region35: #{tpu_custom_call.1} parent=31 // pred_region
          %s185 = sand.u32 %s25, 1
          %s186 = sand.u32 %s25, 1
          %s187 = smul.addr %s186, 16
          %s188 = scalar_lea.vmem [#allocation3], %s187
          %s189 = smul.addr %s15, 8
          %s190 = scalar_lea.vmem %s0, %s189
          // Predicated region
          $region37: #{tpu_custom_call.1} parent=35 // pred_check
            _
          $region38: #{tpu_custom_call.1} parent=35 // pred_check_branch
            %192 = sbr.rel (0) target = $region40
          $region39: #{tpu_custom_call.1} parent=35 // pred_region
            // Predicated region
            $region41: #{tpu_custom_call.1} parent=39 // pred_check
              _
            $region42: #{tpu_custom_call.1} parent=39 // pred_check_branch
              %194 = sbr.rel (0) target = $region44
            $region43: #{tpu_custom_call.1} parent=39 // pred_region
              // Predicated region
              $region56: #{tpu_custom_call.1} parent=43 // pred_check
                _
              $region57: #{tpu_custom_call.1} parent=43 // pred_check_branch
                %212 = sbr.rel (0) target = $region59
              $region58: #{tpu_custom_call.1} parent=43 // pred_region
                loop: start=0, step=1, limit=1
                $region60: #{tpu_custom_call.1} parent=58 // loop_pre_header
                  _
                $region61: #{tpu_custom_call.1} parent=58 // loop_header
                  %s214 = sphi 0, %s218
                  %p215 = scmp.ge.s32.totalorder %s214, 1
                  %s219 = sphi %s190, %s190
                  %s220 = sphi %s188, %s188
                $region62: #{tpu_custom_call.1} parent=58 // loop_header_branch
                  %217 = sbr.rel (%p215) target = $region66
                $region63: #{tpu_custom_call.1} parent=58 // loop_body
                  %v221 = vld [vmem:[%s219] sm:$0xff]
                  %222 = vst [vmem:[%s220] sm:$0xff] %v221
                  %v223 = vld [vmem:[%s219 + $0x18] sm:$0xff]
                  %224 = vst [vmem:[%s220 + $0x8] sm:$0xff] %v223
                $region64: #{tpu_custom_call.1} parent=58 // loop_footer
                  %s218 = sadd.s32 1, %s214
                $region65: #{tpu_custom_call.1} parent=58 // loop_footer_branch
                  %213 = sbr.rel target = $region61
                $region66: #{tpu_custom_call.1} parent=58 // loop_exit
                  _
              $region59: #{tpu_custom_call.1} parent=43 // pred_fallthru
                _
              // Predicated region
              $region67: #{tpu_custom_call.1} parent=43 // pred_check
                _
              $region68: #{tpu_custom_call.1} parent=43 // pred_check_branch
                %226 = sbr.rel target = $region70
              $region69: #{tpu_custom_call.1} parent=43 // pred_region
                _
              $region70: #{tpu_custom_call.1} parent=43 // pred_fallthru
                _
            $region44: #{tpu_custom_call.1} parent=39 // pred_fallthru
              _
            // Predicated region
            $region45: #{tpu_custom_call.1} parent=39 // pred_check
              _
            $region46: #{tpu_custom_call.1} parent=39 // pred_check_branch
              %196 = sbr.rel target = $region48
            $region47: #{tpu_custom_call.1} parent=39 // pred_region
              %s198 = ssub.s32 256, 1
              loop: start=0, step=1, limit=1
              $region49: #{tpu_custom_call.1} parent=47 // loop_pre_header
                _
              $region50: #{tpu_custom_call.1} parent=47 // loop_header
                %s200 = sphi 0, %s204
                %p201 = scmp.ge.s32.totalorder %s200, 1
                %s205 = sphi %s190, %s190
                %s206 = sphi %s188, %s188
              $region51: #{tpu_custom_call.1} parent=47 // loop_header_branch
                %203 = sbr.rel (%p201) target = $region55
              $region52: #{tpu_custom_call.1} parent=47 // loop_body
                %v207 = vld [vmem:[%s205] sm:%s198]
                %208 = vst [vmem:[%s206] sm:%s198] %v207
                %v209 = vld [vmem:[%s205 + $0x18] sm:%s198]
                %210 = vst [vmem:[%s206 + $0x8] sm:%s198] %v209
              $region53: #{tpu_custom_call.1} parent=47 // loop_footer
                %s204 = sadd.s32 1, %s200
              $region54: #{tpu_custom_call.1} parent=47 // loop_footer_branch
                %199 = sbr.rel target = $region50
              $region55: #{tpu_custom_call.1} parent=47 // loop_exit
                _
            $region48: #{tpu_custom_call.1} parent=39 // pred_fallthru
              _
          $region40: #{tpu_custom_call.1} parent=35 // pred_fallthru
            _
          %227 = vnop
        $region36: #{tpu_custom_call.1} parent=31 // pred_fallthru
          _
      $region32: #{tpu_custom_call.1} parent=5 // pred_fallthru
        _
      %p228 = scmp.le.s32.totalorder 1, %s15
      %p229 = scmp.lt.s32.totalorder %s15, 4
      %p230 = pnand %p228, %p229
      %p231 = pneg %p230
      // Predicated region
      $region71: #{tpu_custom_call.1} parent=5 // pred_check
        _
      $region72: #{tpu_custom_call.1} parent=5 // pred_check_branch
        %233 = sbr.rel (%p230) target = $region74
      $region73: #{tpu_custom_call.1} parent=5 // pred_region
        %s234 = ssub.s32 %s15, 1
        %s235 = sand.u32 %s28, 1
        %s236 = sand.u32 %s28, 1
        %s237 = smul.addr %s236, 16
        %s238 = scalar_lea.vmem [#allocation3], %s237
        // Predicated region
        $region75: #{tpu_custom_call.1} parent=73 // pred_check
          %p239 = pneg %p41
        $region76: #{tpu_custom_call.1} parent=73 // pred_check_branch
          %241 = sbr.rel (%p239) target = $region78
        $region77: #{tpu_custom_call.1} parent=73 // pred_region
          _
        $region78: #{tpu_custom_call.1} parent=73 // pred_fallthru
          _
        %s242 = sand.u32 %s28, 1
        %s243 = sand.u32 %s28, 1
        %s244 = smul.addr %s243, 16
        %s245 = scalar_lea.vmem [#allocation3], %s244
        %p246 = pneg %p41
        %p247 = pneg %p38
        %p248 = pneg %p62
        %p249 = pneg %p59
        %p250 = pneg %p83
        %p251 = pneg %p80
        %p252 = pneg %p104
        %p253 = pneg %p101
        %p254 = pneg %p125
        %p255 = pneg %p122
        %p256 = pneg %p151
        %p257 = pneg %p148
        %s258 = sand.u32 %s138, 1
        %s259 = scalar_lea.sflag [#allocation5], %s258
        %s260 = sand.u32 %s138, 1
        %s261 = scalar_lea.vmem [#allocation4], %s260
        %v262 = vld [vmem:[%s238] sm:$0xff]
        %v263 = vld [vmem:[%s238 + $0x8] sm:$0xff]
        %v264 = vld [vmem:[%s1] sm:$0xff]
        %v265 = vld [vmem:[%s1 + $0x8] sm:$0xff]
        %v266 = vld [vmem:[%s1 + $0x10] sm:$0xff]
        %v267 = vld [vmem:[%s1 + $0x18] sm:$0xff]
        %v268 = vld [vmem:[%s1 + $0x20] sm:$0xff]
        %v269 = vld [vmem:[%s1 + $0x28] sm:$0xff]
        %v270 = vld [vmem:[%s1 + $0x30] sm:$0xff]
        %v271 = vld [vmem:[%s1 + $0x38] sm:$0xff]
        %v272 = vld [vmem:[%s1 + $0x40] sm:$0xff]
        %v273 = vld [vmem:[%s1 + $0x48] sm:$0xff]
        %v274 = vld [vmem:[%s1 + $0x50] sm:$0xff]
        %v275 = vld [vmem:[%s1 + $0x58] sm:$0xff]
        %v276 = vld [vmem:[%s1 + $0x60] sm:$0xff]
        %v277 = vld [vmem:[%s1 + $0x68] sm:$0xff]
        %v278 = vld [vmem:[%s1 + $0x70] sm:$0xff]
        %v279 = vld [vmem:[%s1 + $0x78] sm:$0xff]
        %v280 = vld [vmem:[%s2] sm:$0xff]
        %v281 = vld [vmem:[%s2 + $0x8] sm:$0xff]
        %v282 = vld [vmem:[%s2 + $0x10] sm:$0xff]
        %v283 = vld [vmem:[%s2 + $0x18] sm:$0xff]
        %v284 = vld [vmem:[%s2 + $0x20] sm:$0xff]
        %v285 = vld [vmem:[%s2 + $0x28] sm:$0xff]
        %v286 = vld [vmem:[%s2 + $0x30] sm:$0xff]
        %v287 = vld [vmem:[%s2 + $0x38] sm:$0xff]
        %v288 = vld [vmem:[%s2 + $0x40] sm:$0xff]
        %v289 = vld [vmem:[%s2 + $0x48] sm:$0xff]
        %v290 = vld [vmem:[%s2 + $0x50] sm:$0xff]
        %v291 = vld [vmem:[%s2 + $0x58] sm:$0xff]
        %v292 = vld [vmem:[%s2 + $0x60] sm:$0xff]
        %v293 = vld [vmem:[%s2 + $0x68] sm:$0xff]
        %v294 = vld [vmem:[%s2 + $0x70] sm:$0xff]
        %v295 = vld [vmem:[%s2 + $0x78] sm:$0xff]
        %297 = vset.pattern.permute.xlu0 0
        %298 = vperm.xlu0 %297, %v280
        %v299 = vpop.permute.xlu0 %298
        %302 = vset.pattern.permute.xlu0 0
        %303 = vperm.xlu0 %302, %v281
        %v304 = vpop.permute.xlu0 %303
        %307 = vset.pattern.permute.xlu0 0
        %308 = vperm.xlu0 %307, %v282
        %v309 = vpop.permute.xlu0 %308
        %312 = vset.pattern.permute.xlu0 0
        %313 = vperm.xlu0 %312, %v283
        %v314 = vpop.permute.xlu0 %313
        %317 = vset.pattern.permute.xlu0 0
        %318 = vperm.xlu0 %317, %v284
        %v319 = vpop.permute.xlu0 %318
        %322 = vset.pattern.permute.xlu0 0
        %323 = vperm.xlu0 %322, %v285
        %v324 = vpop.permute.xlu0 %323
        %327 = vset.pattern.permute.xlu0 0
        %328 = vperm.xlu0 %327, %v286
        %v329 = vpop.permute.xlu0 %328
        %332 = vset.pattern.permute.xlu0 0
        %333 = vperm.xlu0 %332, %v287
        %v334 = vpop.permute.xlu0 %333
        %337 = vset.pattern.permute.xlu0 0
        %338 = vperm.xlu0 %337, %v288
        %v339 = vpop.permute.xlu0 %338
        %342 = vset.pattern.permute.xlu0 0
        %343 = vperm.xlu0 %342, %v289
        %v344 = vpop.permute.xlu0 %343
        %347 = vset.pattern.permute.xlu0 0
        %348 = vperm.xlu0 %347, %v290
        %v349 = vpop.permute.xlu0 %348
        %352 = vset.pattern.permute.xlu0 0
        %353 = vperm.xlu0 %352, %v291
        %v354 = vpop.permute.xlu0 %353
        %357 = vset.pattern.permute.xlu0 0
        %358 = vperm.xlu0 %357, %v292
        %v359 = vpop.permute.xlu0 %358
        %362 = vset.pattern.permute.xlu0 0
        %363 = vperm.xlu0 %362, %v293
        %v364 = vpop.permute.xlu0 %363
        %367 = vset.pattern.permute.xlu0 0
        %368 = vperm.xlu0 %367, %v294
        %v369 = vpop.permute.xlu0 %368
        %372 = vset.pattern.permute.xlu0 0
        %373 = vperm.xlu0 %372, %v295
        %v374 = vpop.permute.xlu0 %373
        %vm376 = vcmask 130048
        %v378 = vsel %vm376, %v264, 0
        %v381 = vsel %vm376, %v265, 0
        %v384 = vsel %vm376, %v266, 0
        %v387 = vsel %vm376, %v267, 0
        %v390 = vsel %vm376, %v268, 0
        %v393 = vsel %vm376, %v269, 0
        %v396 = vsel %vm376, %v270, 0
        %v399 = vsel %vm376, %v271, 0
        %v402 = vsel %vm376, %v272, 0
        %v405 = vsel %vm376, %v273, 0
        %v408 = vsel %vm376, %v274, 0
        %v411 = vsel %vm376, %v275, 0
        %v414 = vsel %vm376, %v276, 0
        %v417 = vsel %vm376, %v277, 0
        %v420 = vsel %vm376, %v278, 0
        %v423 = vsel %vm376, %v279, 0
        %425 = vmatpush.msra.mxu0 0.0
        %426 = vmatpush.msra.mxu0 0.0
        %427 = vmatpush.msra.mxu0 0.0
        %428 = vmatpush.msra.mxu0 0.0
        %429 = vmatpush.msra.mxu0 0.0
        %430 = vmatpush.msra.mxu0 0.0
        %431 = vmatpush.msra.mxu0 0.0
        %432 = vmatpush.msra.mxu0 0.0
        %433 = vmatpush.msra.mxu0 0.0
        %434 = vmatpush.msra.mxu0 0.0
        %435 = vmatpush.msra.mxu0 0.0
        %436 = vmatpush.msra.mxu0 0.0
        %437 = vmatpush.msra.mxu0 0.0
        %438 = vmatpush.msra.mxu0 0.0
        %439 = vmatpush.msra.mxu0 %v263
        %440 = vmatpush.msra.mxu0 %v262
        %441 = vmatmul.f32.gmra.mxu0 %v378
        %v442 = vpop.f32.mrf.mxu0
        %v443 = vadd.f32 %v299, %v442
        %444 = vmatmul.f32.gmra.mxu0 %v381
        %v445 = vpop.f32.mrf.mxu0
        %v446 = vadd.f32 %v304, %v445
        %447 = vmatmul.f32.gmra.mxu0 %v384
        %v448 = vpop.f32.mrf.mxu0
        %v449 = vadd.f32 %v309, %v448
        %450 = vmatmul.f32.gmra.mxu0 %v387
        %v451 = vpop.f32.mrf.mxu0
        %v452 = vadd.f32 %v314, %v451
        %453 = vmatmul.f32.gmra.mxu0 %v390
        %v454 = vpop.f32.mrf.mxu0
        %v455 = vadd.f32 %v319, %v454
        %456 = vmatmul.f32.gmra.mxu0 %v393
        %v457 = vpop.f32.mrf.mxu0
        %v458 = vadd.f32 %v324, %v457
        %459 = vmatmul.f32.gmra.mxu0 %v396
        %v460 = vpop.f32.mrf.mxu0
        %v461 = vadd.f32 %v329, %v460
        %462 = vmatmul.f32.gmra.mxu0 %v399
        %v463 = vpop.f32.mrf.mxu0
        %v464 = vadd.f32 %v334, %v463
        %465 = vmatmul.f32.gmra.mxu0 %v402
        %v466 = vpop.f32.mrf.mxu0
        %v467 = vadd.f32 %v339, %v466
        %468 = vmatmul.f32.gmra.mxu0 %v405
        %v469 = vpop.f32.mrf.mxu0
        %v470 = vadd.f32 %v344, %v469
        %471 = vmatmul.f32.gmra.mxu0 %v408
        %v472 = vpop.f32.mrf.mxu0
        %v473 = vadd.f32 %v349, %v472
        %474 = vmatmul.f32.gmra.mxu0 %v411
        %v475 = vpop.f32.mrf.mxu0
        %v476 = vadd.f32 %v354, %v475
        %477 = vmatmul.f32.gmra.mxu0 %v414
        %v478 = vpop.f32.mrf.mxu0
        %v479 = vadd.f32 %v359, %v478
        %480 = vmatmul.f32.gmra.mxu0 %v417
        %v481 = vpop.f32.mrf.mxu0
        %v482 = vadd.f32 %v364, %v481
        %483 = vmatmul.f32.gmra.mxu0 %v420
        %v484 = vpop.f32.mrf.mxu0
        %v485 = vadd.f32 %v369, %v484
        %486 = vmatmul.f32.gmra.mxu0 %v423
        %v487 = vpop.f32.mrf.mxu0
        %v488 = vadd.f32 %v374, %v487
        %489 = vdwg.mxu0
        %v490 = vtanh.pop %v443
        %v491 = vtanh.pop %v446
        %v492 = vtanh.pop %v449
        %v493 = vtanh.pop %v452
        %v494 = vtanh.pop %v455
        %v495 = vtanh.pop %v458
        %v496 = vtanh.pop %v461
        %v497 = vtanh.pop %v464
        %v498 = vtanh.pop %v467
        %v499 = vtanh.pop %v470
        %v500 = vtanh.pop %v473
        %v501 = vtanh.pop %v476
        %v502 = vtanh.pop %v479
        %v503 = vtanh.pop %v482
        %v504 = vtanh.pop %v485
        %v505 = vtanh.pop %v488
        %v506 = vld [vmem:[%s3] sm:$0x1]
        %s507 = sld [smem:[#allocation2]]
        %v508 = vstv %s507
        %509 = vmatpush.msra.mxu0 %v505
        %510 = vmatpush.msra.mxu0 %v504
        %511 = vmatpush.msra.mxu0 %v503
        %512 = vmatpush.msra.mxu0 %v502
        %513 = vmatpush.msra.mxu0 %v501
        %514 = vmatpush.msra.mxu0 %v500
        %515 = vmatpush.msra.mxu0 %v499
        %516 = vmatpush.msra.mxu0 %v498
        %517 = vmatpush.msra.mxu0 %v497
        %518 = vmatpush.msra.mxu0 %v496
        %519 = vmatpush.msra.mxu0 %v495
        %520 = vmatpush.msra.mxu0 %v494
        %521 = vmatpush.msra.mxu0 %v493
        %522 = vmatpush.msra.mxu0 %v492
        %523 = vmatpush.msra.mxu0 %v491
        %524 = vmatpush.msra.mxu0 %v490
        %525 = vmatmul.f32.gmra.mxu0 %v506
        %v526 = vpop.f32.mrf.mxu0
        %v527 = vadd.f32 %v508, %v526
        %528 = vdwg.mxu0
        %v529 = vsub.f32 0.0, %v527
        %v530 = vmul.f32 %v529, 1.442695
        %v531 = vpow.pop %v530
        %v532 = vadd.f32 %v531, 1.0
        %v533 = vrcp.pop %v532
        %v534 = vmul.f32 %v532, %v533
        %v535 = vsub.f32 1.0, %v534
        %v536 = vmul.f32 %v533, %v535
        %v537 = vadd.f32 %v533, %v536
        %vm538 = vweird.f32 %v532
        %vm539 = vweird.f32 %v533
        %vm540 = vmor %vm538, %vm539
        %v541 = vsel %vm540, %v533, %v537
        %v542 = vand.u32 2147483647, %v532
        %vm543 = vcmp.eq.f32.partialorder %v542, 8.507059e+37
        %v544 = vand.u32 %v532, 2147483648
        %v545 = vor.u32 1.1754944e-38, %v544
        %v546 = vsel %vm543, %v545, %v541
        %v547 = vmul.f32 1.0, %v546
        %548 = vst [vmem:[%s261] sm:$0x1] %v547
        %s549 = sand.u32 %s138, 1
        %s550 = scalar_lea.sflag [#allocation5], %s549
        %s551 = sand.u32 %s138, 1
        %s552 = scalar_lea.vmem [#allocation4], %s551
        // Predicated region
        $region79: #{tpu_custom_call.1} parent=73 // pred_check
          %p553 = pneg %p148
        $region80: #{tpu_custom_call.1} parent=73 // pred_check_branch
          %555 = sbr.rel (%p553) target = $region82
        $region81: #{tpu_custom_call.1} parent=73 // pred_region
          %557 = vsyncadd %s550, 0
          %s558 = scalar_lea.hbm %s5, %s20
          %s560 = sshll.u32 %s552, 4
          %s561 = int_to_ptr.vmem [resolvable:$true] %s560
          %s562 = sshll.u32 %s558, 4
          %s563 = int_to_ptr.hbm [resolvable:$true] %s562
          %565 = dma.vmem_to_hbm [thread:$0]  %s561, 16, %s563, %s550
        $region82: #{tpu_custom_call.1} parent=73 // pred_fallthru
          _
      $region74: #{tpu_custom_call.1} parent=5 // pred_fallthru
        _
      %p566 = scmp.le.s32.totalorder 2, %s15
      // Predicated region
      $region83: #{tpu_custom_call.1} parent=5 // pred_check
        %p567 = pneg %p566
      $region84: #{tpu_custom_call.1} parent=5 // pred_check_branch
        %569 = sbr.rel (%p567) target = $region86
      $region85: #{tpu_custom_call.1} parent=5 // pred_region
        %s570 = ssub.s32 %s15, 2
        // Predicated region
        $region87: #{tpu_custom_call.1} parent=85 // pred_check
          %p571 = pneg %p154
        $region88: #{tpu_custom_call.1} parent=85 // pred_check_branch
          %573 = sbr.rel (%p571) target = $region90
        $region89: #{tpu_custom_call.1} parent=85 // pred_region
          %s574 = sand.u32 %s139, 1
          %s575 = scalar_lea.sflag [#allocation5], %s574
          %s576 = sand.u32 %s139, 1
          %s577 = scalar_lea.vmem [#allocation4], %s576
          %579 = dma.done %s575, 16
        $region90: #{tpu_custom_call.1} parent=85 // pred_fallthru
          _
      $region86: #{tpu_custom_call.1} parent=5 // pred_fallthru
        _
    $region6: #{tpu_custom_call.1} parent=1 // loop_footer
      %s19 = sadd.s32 1, %s15
    $region7: #{tpu_custom_call.1} parent=1 // loop_footer_branch
      %14 = sbr.rel target = $region3
    $region8: #{tpu_custom_call.1} parent=1 // loop_exit
      _
    %580 = vsyncpa [#allocation5], 1
    %s581 = scalar_lea.sflag [#allocation5], 1
    %582 = vsyncpa %s581, 1

</llo_original>
